<compile_context>
chip_gen: v7x
topology: tpu7x:2x2x1
jax: 0.10.0
libtpu: 0.0.40
codegen_flags: <defaults>
</compile_context>

<pallas_src>
import jax
import jax.numpy as jnp
from jax.experimental import pallas as pl
from jax.experimental.pallas import tpu as pltpu


# ----------------------------------------------------------------------------
# Kernel
# ----------------------------------------------------------------------------
def embeddings_kernel(patch_ref, w_ref, addend_ref, out_ref):
    """One tile of TM = F*n_patches patch rows per grid step.

    patch_ref:  (TM, K)   bf16  flattened patches of F consecutive frames
    w_ref:      (K, Hd)   bf16  patch-projection weight (conv reshaped), resident
    addend_ref: (TM, Hd)  f32   (position_embeddings + conv bias), tiled F times, resident
    out_ref:    (TM, Hd)  bf16
    """
    # MXU matmul: bf16 operands, f32 accumulation.
    proj = jnp.dot(patch_ref[...], w_ref[...],
                   preferred_element_type=jnp.float32)          # (TM, Hd) f32
    # Single f32 VPU add (bias already folded into the position embeddings),
    # then cast to the (bf16) output dtype on store.
    out_ref[...] = (proj + addend_ref[...]).astype(out_ref.dtype)
    # Dropout is identity at inference.


# ----------------------------------------------------------------------------
# Wrapper
# ----------------------------------------------------------------------------
def _round_up(x, m):
    return ((x + m - 1) // m) * m


def _frames_per_step(S, n_patches, max_rows=2048):
    """Largest divisor F of S with F*n_patches <= max_rows, preferring a grid
    of >= 2 steps so both v7x TensorCores get balanced work."""
    best = 1
    for f in range(1, S + 1):
        if S % f:
            continue
        rows = f * n_patches
        if rows > max_rows:
            break
        if f == 1 or S // f >= 2:
            best = f
    return best


def embeddings_forward(x, params, patch_size, out_dtype=jnp.bfloat16):
    """x: (B, S, C, W, H) float32 with B == 1 (the PyTorch forward squeezes
    dim 0 before the patch conv).  Returns (S, n_patches, hidden)."""
    B, S, C, W, H = x.shape
    assert B == 1, "PyTorch forward squeezes dim 0; B must be 1"
    p = patch_size
    assert W % p == 0 and H % p == 0

    # TODO(synk): TemporalContextBlock (self.tcm) is not defined in the
    # provided spec; it is treated as identity here.
    frames = x[0]                                               # (S, C, W, H)

    gh, gw = W // p, H // p
    n_patches = gh * gw
    K = C * p * p
    hidden = params["w"].shape[1]

    # Patchify (layout plumbing): Conv2d with kernel=stride=p over
    # non-overlapping patches == per-patch linear projection.  Flatten order
    # (C, p, p) matches the PyTorch conv-weight layout.  Under jit the
    # transpose and the bf16 cast fuse into a single XLA pass (one bf16
    # intermediate write instead of f32 + separate cast).
    patches = frames.reshape(S, C, gh, p, gw, p)
    patches = patches.transpose(0, 2, 4, 1, 3, 5)
    patches = patches.reshape(S * n_patches, K).astype(jnp.bfloat16)

    # Frames per grid step / M tiling.
    F = _frames_per_step(S, n_patches)
    TM = F * n_patches
    M = S * n_patches

    # addend = position_embeddings + bias, precomputed once in f32 and tiled
    # to the F frames of one grid step (grid-invariant, stays resident).
    addend = (params["pos"][0].astype(jnp.float32)
              + params["b"].astype(jnp.float32))                # (n_patches, hidden)
    addend = jnp.tile(addend, (F, 1))                           # (TM, hidden)

    # Lane-dense output: pad hidden (the lane dim) to a multiple of 128 only
    # if the model dim is not already aligned (production ViT dims are).
    # K is NOT zero-padded: the patches block last dim equals the full array
    # dim (legal), and zero-padding the contraction would only inflate HBM
    # traffic on a memory/overhead-bound op.
    w = params["w"].astype(jnp.bfloat16)                        # (K, hidden)
    Hd = hidden
    Hd_pad = _round_up(Hd, 128) if Hd % 128 else Hd
    if Hd_pad != Hd:
        w = jnp.pad(w, ((0, 0), (0, Hd_pad - Hd)))
        addend = jnp.pad(addend, ((0, 0), (0, Hd_pad - Hd)))

    out = pl.pallas_call(
        embeddings_kernel,
        out_shape=jax.ShapeDtypeStruct((M, Hd_pad), out_dtype),
        grid=(M // TM,),
        in_specs=[
            pl.BlockSpec((TM, K), lambda m: (m, 0)),        # per-step patch rows
            pl.BlockSpec((K, Hd_pad), lambda m: (0, 0)),    # resident weight
            pl.BlockSpec((TM, Hd_pad), lambda m: (0, 0)),   # resident pos+bias
        ],
        out_specs=pl.BlockSpec((TM, Hd_pad), lambda m: (m, 0)),
        compiler_params=pltpu.CompilerParams(
            dimension_semantics=("parallel",),      # M tiles shard across TCs
            vmem_limit_bytes=32 * 1024 * 1024,      # explicit scoped-VMEM budget
        ),
    )(patches, w, addend)

    if Hd_pad != Hd:
        out = out[:, :Hd]
    return out.reshape(S, n_patches, Hd)


# ----------------------------------------------------------------------------
# Params / reference / test
# ----------------------------------------------------------------------------
def init_params(key, in_channels, hidden, patch_size, n_patches):
    kw, kb, kp = jax.random.split(key, 3)
    K = in_channels * patch_size * patch_size
    # PyTorch Conv2d weight layout (hidden, C, p, p) -> matmul layout (K, hidden),
    # stored bf16 in HBM (halves the weight DMA); f32 accumulation in-kernel.
    w_conv = jax.random.normal(
        kw, (hidden, in_channels, patch_size, patch_size), jnp.float32) * 0.02
    w = w_conv.reshape(hidden, K).T.astype(jnp.bfloat16)
    b = jax.random.normal(kb, (1, hidden), jnp.float32) * 0.02
    # PyTorch initializes position_embeddings to zeros; random values here so
    # the add path is actually exercised by the test.
    pos = jax.random.normal(kp, (1, n_patches, hidden), jnp.float32) * 0.02
    return {"w": w, "b": b, "pos": pos}


def reference_embeddings(x, params, patch_size):
    """Pure-JAX reference mirroring the PyTorch forward (tcm/dropout = identity)."""
    B, S, C, W, H = x.shape
    frames = x[0]
    p = patch_size
    gh, gw = W // p, H // p
    K = C * p * p
    patches = frames.reshape(S, C, gh, p, gw, p) \
                    .transpose(0, 2, 4, 1, 3, 5).reshape(S, gh * gw, K)
    w = params["w"].astype(jnp.float32)
    proj = patches @ w + params["b"]
    return proj + params["pos"]


if __name__ == "__main__":
    # Small shapes consistent with the module: B=1 (squeezed), S=8 frames,
    # C=4 channels, 16x16 images, patch=4 -> 16 patches, hidden=32.
    B, S, C, W, H = 1, 8, 4, 16, 16
    hidden, patch = 32, 4
    n_patches = (W // patch) * (H // patch)

    key = jax.random.PRNGKey(0)
    kx, kp = jax.random.split(key)
    x = jax.random.normal(kx, (B, S, C, W, H), jnp.float32)
    params = init_params(kp, C, hidden, patch, n_patches)

    fwd = jax.jit(lambda x, params: embeddings_forward(x, params, patch))
    out = jax.block_until_ready(fwd(x, params))

    ref = reference_embeddings(x, params, patch)
    assert out.shape == (S, n_patches, hidden)
    # bf16 MXU inputs + bf16 output vs f32 reference -> loosened tolerance.
    assert jnp.allclose(out.astype(jnp.float32), ref, atol=2e-2, rtol=2e-2)

    print("KERNEL_OK")
</pallas_src>

<mosaic_0001>
module attributes {stable_mosaic.version = 11 : i64} {
  func.func @embeddings_kernel(%arg0: i32, %arg1: memref<64x64xbf16, #tpu.memory_space<vmem>>, %arg2: memref<64x128xbf16, #tpu.memory_space<vmem>>, %arg3: memref<64x128xf32, #tpu.memory_space<vmem>>, %arg4: memref<64x128xbf16, #tpu.memory_space<vmem>>) attributes {dimension_semantics = [#tpu.dimension_semantics<parallel>], iteration_bounds = array<i64: 2>, scalar_prefetch = 0 : i64, scratch_operands = 0 : i64, tpu.core_type = #tpu.core_type<tc>, window_params = [{transform_indices = @transform_0, window_bounds = array<i64: 64, 64>}, {pipeline_mode = #tpu.pipeline_mode<synchronous>, transform_indices = @transform_1, window_bounds = array<i64: 64, 128>}, {pipeline_mode = #tpu.pipeline_mode<synchronous>, transform_indices = @transform_2, window_bounds = array<i64: 64, 128>}, {transform_indices = @transform_3, window_bounds = array<i64: 64, 128>}]} {
    %c0 = arith.constant 0 : index
    %c0_0 = arith.constant 0 : index
    %0 = vector.load %arg1[%c0, %c0_0] : memref<64x64xbf16, #tpu.memory_space<vmem>>, vector<64x64xbf16>
    %c0_1 = arith.constant 0 : index
    %c0_2 = arith.constant 0 : index
    %1 = vector.load %arg2[%c0_1, %c0_2] : memref<64x128xbf16, #tpu.memory_space<vmem>>, vector<64x128xbf16>
    %cst = arith.constant dense<0.000000e+00> : vector<64x128xf32>
    %2 = tpu.matmul %0, %1, %cst {dimension_numbers = #tpu.dot_dimension_numbers<[1], [0], [0], [1], [0, 0, 1, 1], [], []>} : vector<64x64xbf16>, vector<64x128xbf16>, vector<64x128xf32> -> vector<64x128xf32>
    %c0_3 = arith.constant 0 : index
    %c0_4 = arith.constant 0 : index
    %3 = vector.load %arg3[%c0_3, %c0_4] : memref<64x128xf32, #tpu.memory_space<vmem>>, vector<64x128xf32>
    %4 = arith.addf %2, %3 : vector<64x128xf32>
    %5 = arith.truncf %4 : vector<64x128xf32> to vector<64x128xbf16>
    %c0_5 = arith.constant 0 : index
    %c0_6 = arith.constant 0 : index
    %6 = vector.load %arg4[%c0_5, %c0_6] : memref<64x128xbf16, #tpu.memory_space<vmem>>, vector<64x128xbf16>
    tpu.vector_store %arg4[%c0_5, %c0_6], %5 {strides = array<i32>} : memref<64x128xbf16, #tpu.memory_space<vmem>>, vector<64x128xbf16>,
    return
  }
  func.func @transform_0(%arg0: i32) -> (i32, i32) {
    %c0_i32 = arith.constant 0 : i32
    %c0_i32_0 = arith.constant 0 : i32
    return %arg0, %c0_i32 : i32, i32
  }
  func.func @transform_1(%arg0: i32) -> (i32, i32) {
    %c0_i32 = arith.constant 0 : i32
    %c0_i32_0 = arith.constant 0 : i32
    %c0_i32_1 = arith.constant 0 : i32
    return %c0_i32, %c0_i32_0 : i32, i32
  }
  func.func @transform_2(%arg0: i32) -> (i32, i32) {
    %c0_i32 = arith.constant 0 : i32
    %c0_i32_0 = arith.constant 0 : i32
    %c0_i32_1 = arith.constant 0 : i32
    return %c0_i32, %c0_i32_0 : i32, i32
  }
  func.func @transform_3(%arg0: i32) -> (i32, i32) {
    %c0_i32 = arith.constant 0 : i32
    %c0_i32_0 = arith.constant 0 : i32
    return %arg0, %c0_i32 : i32, i32
  }
}

</mosaic_0001>

<llo_original>
// kernel: _lambda_.1
$region0: #{_lambda_.1}
  #allocation0 [shape = 'u32[]', space=smem, size = 0x4, offset = 0x4, fixed_abs, tag = 'smem constant byte address 0x4 - core index']
  #allocation1 [shape = 'u32[144,128]{1,0:T(1,128)}', space=vmem, size = 0x12000, scoped, tag = 'internal scratch']
  %s0 = inlined_call_operand.vmem [shape: bf16[128,64], index: 0, kind: input, shape index: {}]
  %s1 = inlined_call_operand.vmem [shape: bf16[64,128], index: 1, kind: input, shape index: {}]
  %s2 = inlined_call_operand.vmem [shape: f32[64,128], index: 2, kind: input, shape index: {}]
  %s3 = inlined_call_operand.hbm [shape: bf16[128,128], index: 3, kind: output, shape index: {}]
  %s4 = sld [smem:[#allocation0]]
  $region45: #{_lambda_.1} parent=0
    _
  %s6 = ssub.s32 1, %s4
  %s7 = scalar_select 0, %s6, %s4
  $region1: #{_lambda_.1} parent=0
    #allocation2 [shape = 'u8[32768]{0}', space=vmem, size = 0x8000, scoped, tag = 'output window, operand 0']
    #allocation3 [shape = 's32[2]{0}', space=sflag, size = 0x8, scoped, tag = 'scoped memory for _lambda_.1']
    %8 = vsyncpa [#allocation3], 0
    %s9 = scalar_lea.sflag [#allocation3], 1
    %10 = vsyncpa %s9, 0
    loop: start=0, step=1, limit=4
    $region2: #{_lambda_.1} parent=1 // loop_pre_header
      _
    $region3: #{_lambda_.1} parent=1 // loop_header
      %s12 = sphi 0, %s16
      %p13 = scmp.ge.s32.totalorder %s12, 4
      %s22 = sphi 0, %s24
      %s25 = sphi 0, %s22
      %s26 = sphi 0, %s25
      %s42 = sphi 0, %s26
      %s46 = sphi 0, %s46
      %s48 = sphi 0, %s46
      %s49 = sphi 0, %s48
      %s63 = sphi 0, %s49
      %s67 = sphi 0, %s67
      %s69 = sphi 0, %s67
      %s70 = sphi 0, %s69
      %s84 = sphi 0, %s70
      %s90 = sphi 0, %s92
      %s93 = sphi 0, %s90
      %s94 = sphi 0, %s93
      %s110 = sphi 0, %s94
    $region4: #{_lambda_.1} parent=1 // loop_header_branch
      %15 = sbr.rel (%p13) target = $region8
    $region5: #{_lambda_.1} parent=1 // loop_body
      %s17 = ssub.s32 %s12, 1
      %s18 = ssub.s32 %s12, 2
      %s19 = sadd.s32 %s12, 1
      %s20 = ssub.s32 %s12, %s19
      %p21 = scmp.eq.s32.totalorder %s20, 0
      %s23 = sadd.s32 %s22, 1
      %s24 = scalar_select %p21, %s22, %s23
      %p27 = pneg %p21
      %p28 = scmp.eq.s32.totalorder %s12, 1
      %p29 = por %p27, %p28
      %p30 = scmp.ne.s32.totalorder %s22, %s25
      %p31 = scmp.eq.s32.totalorder %s12, 0
      %p32 = por %p30, %p31
      %p33 = scmp.ne.s32.totalorder %s22, %s25
      %p34 = scmp.eq.s32.totalorder %s17, 1
      %p35 = por %p33, %p34
      %p36 = scmp.ne.s32.totalorder %s25, %s26
      %p37 = scmp.eq.s32.totalorder %s17, 0
      %p38 = por %p36, %p37
      %p39 = scmp.ne.s32.totalorder %s25, %s26
      %p40 = scmp.eq.s32.totalorder %s18, 1
      %p41 = por %p39, %p40
      %p43 = scmp.ne.s32.totalorder %s26, %s42
      %p44 = scmp.eq.s32.totalorder %s18, 0
      %p45 = por %p43, %p44
      %s47 = sadd.s32 %s46, 1
      %p50 = scmp.eq.s32.totalorder %s12, 1
      %p51 = scmp.ne.s32.totalorder %s46, %s48
      %p52 = scmp.eq.s32.totalorder %s12, 0
      %p53 = por %p51, %p52
      %p54 = scmp.ne.s32.totalorder %s46, %s48
      %p55 = scmp.eq.s32.totalorder %s17, 1
      %p56 = por %p54, %p55
      %p57 = scmp.ne.s32.totalorder %s48, %s49
      %p58 = scmp.eq.s32.totalorder %s17, 0
      %p59 = por %p57, %p58
      %p60 = scmp.ne.s32.totalorder %s48, %s49
      %p61 = scmp.eq.s32.totalorder %s18, 1
      %p62 = por %p60, %p61
      %p64 = scmp.ne.s32.totalorder %s49, %s63
      %p65 = scmp.eq.s32.totalorder %s18, 0
      %p66 = por %p64, %p65
      %s68 = sadd.s32 %s67, 1
      %p71 = scmp.eq.s32.totalorder %s12, 1
      %p72 = scmp.ne.s32.totalorder %s67, %s69
      %p73 = scmp.eq.s32.totalorder %s12, 0
      %p74 = por %p72, %p73
      %p75 = scmp.ne.s32.totalorder %s67, %s69
      %p76 = scmp.eq.s32.totalorder %s17, 1
      %p77 = por %p75, %p76
      %p78 = scmp.ne.s32.totalorder %s69, %s70
      %p79 = scmp.eq.s32.totalorder %s17, 0
      %p80 = por %p78, %p79
      %p81 = scmp.ne.s32.totalorder %s69, %s70
      %p82 = scmp.eq.s32.totalorder %s18, 1
      %p83 = por %p81, %p82
      %p85 = scmp.ne.s32.totalorder %s70, %s84
      %p86 = scmp.eq.s32.totalorder %s18, 0
      %p87 = por %p85, %p86
      %s88 = ssub.s32 %s12, %s19
      %p89 = scmp.eq.s32.totalorder %s88, 0
      %s91 = sadd.s32 %s90, 1
      %s92 = scalar_select %p89, %s90, %s91
      %p95 = pneg %p89
      %p96 = scmp.eq.s32.totalorder %s12, 1
      %p97 = por %p95, %p96
      %p98 = scmp.ne.s32.totalorder %s90, %s93
      %p99 = scmp.eq.s32.totalorder %s12, 0
      %p100 = por %p98, %p99
      %p101 = scmp.ne.s32.totalorder %s90, %s93
      %p102 = scmp.eq.s32.totalorder %s17, 1
      %p103 = por %p101, %p102
      %p104 = scmp.ne.s32.totalorder %s93, %s94
      %p105 = scmp.eq.s32.totalorder %s17, 0
      %p106 = por %p104, %p105
      %p107 = scmp.ne.s32.totalorder %s93, %s94
      %p108 = scmp.eq.s32.totalorder %s18, 1
      %p109 = por %p107, %p108
      %p111 = scmp.ne.s32.totalorder %s94, %s110
      %p112 = scmp.eq.s32.totalorder %s18, 0
      %p113 = por %p111, %p112
      %p114 = scmp.le.s32.totalorder 1, %s12
      %p115 = scmp.lt.s32.totalorder %s12, 3
      %p116 = pnand %p114, %p115
      %p117 = pneg %p116
      // Predicated region
      $region9: #{_lambda_.1} parent=5 // pred_check
        _
      $region10: #{_lambda_.1} parent=5 // pred_check_branch
        %119 = sbr.rel (%p116) target = $region12
      $region11: #{_lambda_.1} parent=5 // pred_region
        %s120 = ssub.s32 %s12, 1
        // Predicated region
        $region13: #{_lambda_.1} parent=11 // pred_check
          %p121 = pneg %p59
        $region14: #{_lambda_.1} parent=11 // pred_check_branch
          %123 = sbr.rel (%p121) target = $region16
        $region15: #{_lambda_.1} parent=11 // pred_region
          _
        $region16: #{_lambda_.1} parent=11 // pred_fallthru
          _
        // Predicated region
        $region17: #{_lambda_.1} parent=11 // pred_check
          %p124 = pneg %p80
        $region18: #{_lambda_.1} parent=11 // pred_check_branch
          %126 = sbr.rel (%p124) target = $region20
        $region19: #{_lambda_.1} parent=11 // pred_region
          _
        $region20: #{_lambda_.1} parent=11 // pred_fallthru
          _
      $region12: #{_lambda_.1} parent=5 // pred_fallthru
        _
      %p127 = scmp.lt.s32.totalorder %s12, 2
      // Predicated region
      $region21: #{_lambda_.1} parent=5 // pred_check
        %p128 = pneg %p127
      $region22: #{_lambda_.1} parent=5 // pred_check_branch
        %130 = sbr.rel (%p128) target = $region24
      $region23: #{_lambda_.1} parent=5 // pred_region
        // Predicated region
        $region25: #{_lambda_.1} parent=23 // pred_check
          %p131 = pneg %p32
        $region26: #{_lambda_.1} parent=23 // pred_check_branch
          %133 = sbr.rel (%p131) target = $region28
        $region27: #{_lambda_.1} parent=23 // pred_region
          %s134 = smul.u32 8, %s12
          %p135 = scmp.lt.s32.totalorder %s134, 15
          %s136 = scalar_select %p135, %s134, 15
          %s137 = smul.addr %s136, 4
          %s138 = scalar_lea.vmem %s0, %s137
          %s139 = smul.u32 8, %s12
        $region28: #{_lambda_.1} parent=23 // pred_fallthru
          _
      $region24: #{_lambda_.1} parent=5 // pred_fallthru
        _
      %p140 = scmp.le.s32.totalorder 1, %s12
      %p141 = scmp.lt.s32.totalorder %s12, 3
      %p142 = pnand %p140, %p141
      %p143 = pneg %p142
      // Predicated region
      $region29: #{_lambda_.1} parent=5 // pred_check
        _
      $region30: #{_lambda_.1} parent=5 // pred_check_branch
        %145 = sbr.rel (%p142) target = $region32
      $region31: #{_lambda_.1} parent=5 // pred_region
        %s146 = ssub.s32 %s12, 1
        %s147 = smul.u32 8, %s17
        %p148 = scmp.lt.s32.totalorder %s147, 15
        %s149 = scalar_select %p148, %s147, 15
        %s150 = smul.addr %s149, 4
        %s151 = scalar_lea.vmem %s0, %s150
        %p152 = pneg %p38
        %p153 = pneg %p35
        %p154 = pneg %p59
        %p155 = pneg %p56
        %p156 = pneg %p80
        %p157 = pneg %p77
        %p158 = pneg %p106
        %p159 = pneg %p103
        %s160 = sand.u32 %s93, 1
        %s161 = scalar_lea.sflag [#allocation3], %s160
        %s162 = sand.u32 %s93, 1
        %s163 = smul.addr %s162, 32
        %s164 = scalar_lea.vmem [#allocation2], %s163
        %s165 = smul.u32 8, %s17
        %p166 = scmp.lt.s32.totalorder %s165, 15
        %s167 = scalar_select %p166, %s165, 15
        %s168 = smul.addr %s167, 4
        %s169 = scalar_lea.vmem %s0, %s168
        %s170 = smul.u32 8, %s17
        %s171 = smul.u32 8, %s17
        %v173 = vld [vmem:[%s169] sm:$0xf]
        %v174 = vld [vmem:[%s169 + $0x4] sm:$0xf]
        %v175 = vld [vmem:[%s169 + $0x8] sm:$0xf]
        %v176 = vld [vmem:[%s169 + $0xc] sm:$0xf]
        %v177 = vld [vmem:[%s169 + $0x10] sm:$0xf]
        %v178 = vld [vmem:[%s169 + $0x14] sm:$0xf]
        %v179 = vld [vmem:[%s169 + $0x18] sm:$0xf]
        %v180 = vld [vmem:[%s169 + $0x1c] sm:$0xf]
        %v181 = vld [vmem:[%s1] sm:$0xf]
        %v182 = vld [vmem:[%s1 + $0x4] sm:$0xf]
        %v183 = vld [vmem:[%s1 + $0x8] sm:$0xf]
        %v184 = vld [vmem:[%s1 + $0xc] sm:$0xf]
        %v185 = vld [vmem:[%s1 + $0x10] sm:$0xf]
        %v186 = vld [vmem:[%s1 + $0x14] sm:$0xf]
        %v187 = vld [vmem:[%s1 + $0x18] sm:$0xf]
        %v188 = vld [vmem:[%s1 + $0x1c] sm:$0xf]
        %v189 = vld [vmem:[%s2] sm:$0xff]
        %v190 = vld [vmem:[%s2 + $0x8] sm:$0xff]
        %v191 = vld [vmem:[%s2 + $0x10] sm:$0xff]
        %v192 = vld [vmem:[%s2 + $0x18] sm:$0xff]
        %v193 = vld [vmem:[%s2 + $0x20] sm:$0xff]
        %v194 = vld [vmem:[%s2 + $0x28] sm:$0xff]
        %v195 = vld [vmem:[%s2 + $0x30] sm:$0xff]
        %v196 = vld [vmem:[%s2 + $0x38] sm:$0xff]
        %v205 = vunpack.c.l.b16 %v173
        %v206 = vunpack.c.l.b16 %v174
        %v207 = vunpack.c.l.b16 %v175
        %v208 = vunpack.c.l.b16 %v176
        %v209 = vunpack.c.l.b16 %v177
        %v210 = vunpack.c.l.b16 %v178
        %v211 = vunpack.c.l.b16 %v179
        %v212 = vunpack.c.l.b16 %v180
        %v213 = vpack.c.b16 %v206, %v205
        %v214 = vpack.c.b16 %v208, %v207
        %v215 = vpack.c.b16 %v210, %v209
        %v216 = vpack.c.b16 %v212, %v211
        %v225 = vunpack.c.l.b16 %v181
        %v226 = vunpack.c.l.b16 %v182
        %v227 = vunpack.c.l.b16 %v183
        %v228 = vunpack.c.l.b16 %v184
        %v229 = vunpack.c.l.b16 %v185
        %v230 = vunpack.c.l.b16 %v186
        %v231 = vunpack.c.l.b16 %v187
        %v232 = vunpack.c.l.b16 %v188
        %v233 = vpack.c.b16 %v226, %v225
        %v234 = vpack.c.b16 %v228, %v227
        %v235 = vpack.c.b16 %v230, %v229
        %v236 = vpack.c.b16 %v232, %v231
        %vm241 = vcmask 523264
        %v243 = vsel %vm241, %v213, 0
        %v246 = vsel %vm241, %v214, 0
        %v249 = vsel %vm241, %v215, 0
        %v252 = vsel %vm241, %v216, 0
        %254 = vmatprep.subr.bf16.mxu0 0
        %255 = vmatpush1.bf16.msra.mxu0 %v233
        %256 = vmatprep.subr.bf16.mxu0 0
        %257 = vmatpush1.bf16.msra.mxu0 %v234
        %258 = vmatprep.subr.bf16.mxu0 0
        %259 = vmatpush1.bf16.msra.mxu0 %v235
        %260 = vmatprep.subr.bf16.mxu0 0
        %261 = vmatpush1.bf16.msra.mxu0 %v236
        %262 = vmatprep.subr.bf16.mxu0 0
        %263 = vmatpush1.bf16.msra.mxu0 0
        %264 = vmatprep.subr.bf16.mxu0 0
        %265 = vmatpush1.bf16.msra.mxu0 0
        %266 = vmatprep.subr.bf16.mxu0 0
        %267 = vmatpush1.bf16.msra.mxu0 0
        %268 = vmatprep.subr.bf16.mxu0 0
        %269 = vmatpush1.bf16.msra.mxu0 0
        %270 = vmatprep.subr.bf16.mxu0 0
        %271 = vmatpush1.bf16.msra.mxu0 0
        %272 = vmatprep.subr.bf16.mxu0 0
        %273 = vmatpush1.bf16.msra.mxu0 0
        %274 = vmatprep.subr.bf16.mxu0 0
        %275 = vmatpush1.bf16.msra.mxu0 0
        %276 = vmatprep.subr.bf16.mxu0 0
        %277 = vmatpush1.bf16.msra.mxu0 0
        %278 = vmatprep.subr.bf16.mxu0 0
        %279 = vmatpush1.bf16.msra.mxu0 0
        %280 = vmatprep.subr.bf16.mxu0 0
        %281 = vmatpush1.bf16.msra.mxu0 0
        %282 = vmatprep.subr.bf16.mxu0 0
        %283 = vmatpush1.bf16.msra.mxu0 0
        %284 = vmatprep.subr.bf16.mxu0 0
        %285 = vmatpush1.bf16.msra.mxu0 0
        %286 = vmatprep.mubr.bf16.mxu0 0
        %287 = vmatmul.mubr.bf16.gmra.mrb[0].mxu0 %v243
        %v288 = vpop.f32.mrb[0].mxu0
        %v289 = vadd.f32 %v189, %v288
        %v290 = vpop.f32.mrb[0].mxu0
        %v291 = vpop.f32.mrb[0].mxu0
        %v292 = vadd.f32 %v190, %v291
        %v293 = vpop.f32.mrb[0].mxu0
        %294 = vmatprep.mubr.bf16.mxu0 0
        %295 = vmatmul.mubr.bf16.gmra.mrb[0].mxu0 %v246
        %v296 = vpop.f32.mrb[0].mxu0
        %v297 = vadd.f32 %v191, %v296
        %v298 = vpop.f32.mrb[0].mxu0
        %v299 = vpop.f32.mrb[0].mxu0
        %v300 = vadd.f32 %v192, %v299
        %v301 = vpop.f32.mrb[0].mxu0
        %302 = vmatprep.mubr.bf16.mxu0 0
        %303 = vmatmul.mubr.bf16.gmra.mrb[0].mxu0 %v249
        %v304 = vpop.f32.mrb[0].mxu0
        %v305 = vadd.f32 %v193, %v304
        %v306 = vpop.f32.mrb[0].mxu0
        %v307 = vpop.f32.mrb[0].mxu0
        %v308 = vadd.f32 %v194, %v307
        %v309 = vpop.f32.mrb[0].mxu0
        %310 = vmatprep.mubr.bf16.mxu0 0
        %311 = vmatmul.mubr.bf16.gmra.mrb[0].mxu0 %v252
        %v312 = vpop.f32.mrb[0].mxu0
        %v313 = vadd.f32 %v195, %v312
        %v314 = vpop.f32.mrb[0].mxu0
        %v315 = vpop.f32.mrb[0].mxu0
        %v316 = vadd.f32 %v196, %v315
        %v317 = vpop.f32.mrb[0].mxu0
        %318 = vdwg.mxu0
        %v319 = vpack.c.bf16 %v292, %v289
        %v320 = vpack.c.bf16 %v300, %v297
        %v321 = vpack.c.bf16 %v308, %v305
        %v322 = vpack.c.bf16 %v316, %v313
        %v327 = vunpack.c.l.b16 %v319
        %v328 = vunpack.c.h.b16 %v319
        %v329 = vunpack.c.l.b16 %v320
        %v330 = vunpack.c.h.b16 %v320
        %v331 = vunpack.c.l.b16 %v321
        %v332 = vunpack.c.h.b16 %v321
        %v333 = vunpack.c.l.b16 %v322
        %v334 = vunpack.c.h.b16 %v322
        %v335 = vpack.c.b16 %v327, %v327
        %v336 = vpack.c.b16 %v328, %v328
        %v337 = vpack.c.b16 %v329, %v329
        %v338 = vpack.c.b16 %v330, %v330
        %v339 = vpack.c.b16 %v331, %v331
        %v340 = vpack.c.b16 %v332, %v332
        %v341 = vpack.c.b16 %v333, %v333
        %v342 = vpack.c.b16 %v334, %v334
        %351 = vst [vmem:[%s164] sm:$0xf] %v335
        %352 = vst [vmem:[%s164 + $0x4] sm:$0xf] %v336
        %353 = vst [vmem:[%s164 + $0x8] sm:$0xf] %v337
        %354 = vst [vmem:[%s164 + $0xc] sm:$0xf] %v338
        %355 = vst [vmem:[%s164 + $0x10] sm:$0xf] %v339
        %356 = vst [vmem:[%s164 + $0x14] sm:$0xf] %v340
        %357 = vst [vmem:[%s164 + $0x18] sm:$0xf] %v341
        %358 = vst [vmem:[%s164 + $0x1c] sm:$0xf] %v342
        %s359 = sand.u32 %s93, 1
        %s360 = scalar_lea.sflag [#allocation3], %s359
        %s361 = sand.u32 %s93, 1
        %s362 = smul.addr %s361, 32
        %s363 = scalar_lea.vmem [#allocation2], %s362
        // Predicated region
        $region33: #{_lambda_.1} parent=31 // pred_check
          %p364 = pneg %p103
        $region34: #{_lambda_.1} parent=31 // pred_check_branch
          %366 = sbr.rel (%p364) target = $region36
        $region35: #{_lambda_.1} parent=31 // pred_region
          %s367 = smul.u32 8, %s17
          %s369 = ssub.s32 512, 512
          %370 = vsyncadd %s360, %s369
          %s371 = smul.addr %s367, 64
          %s372 = scalar_lea.hbm %s3, %s371
          %s373 = sshll.u32 %s363, 4
          %s374 = int_to_ptr.vmem [resolvable:$true] %s373
          %379 = dma.vmem_to_hbm [thread:$0]  %s374, 512, %s372, %s360, 64, 64, 4
        $region36: #{_lambda_.1} parent=31 // pred_fallthru
          _
      $region32: #{_lambda_.1} parent=5 // pred_fallthru
        _
      %p380 = scmp.le.s32.totalorder 2, %s12
      // Predicated region
      $region37: #{_lambda_.1} parent=5 // pred_check
        %p381 = pneg %p380
      $region38: #{_lambda_.1} parent=5 // pred_check_branch
        %383 = sbr.rel (%p381) target = $region40
      $region39: #{_lambda_.1} parent=5 // pred_region
        %s384 = ssub.s32 %s12, 2
        // Predicated region
        $region41: #{_lambda_.1} parent=39 // pred_check
          %p385 = pneg %p109
        $region42: #{_lambda_.1} parent=39 // pred_check_branch
          %387 = sbr.rel (%p385) target = $region44
        $region43: #{_lambda_.1} parent=39 // pred_region
          %s388 = sand.u32 %s94, 1
          %s389 = scalar_lea.sflag [#allocation3], %s388
          %s390 = sand.u32 %s94, 1
          %s391 = smul.addr %s390, 32
          %s392 = scalar_lea.vmem [#allocation2], %s391
          %393 = dma.done %s389, 512
        $region44: #{_lambda_.1} parent=39 // pred_fallthru
          _
      $region40: #{_lambda_.1} parent=5 // pred_fallthru
        _
    $region6: #{_lambda_.1} parent=1 // loop_footer
      %s16 = sadd.s32 1, %s12
    $region7: #{_lambda_.1} parent=1 // loop_footer_branch
      %11 = sbr.rel target = $region3
    $region8: #{_lambda_.1} parent=1 // loop_exit
      _
    %394 = vsyncpa [#allocation3], 1
    %s395 = scalar_lea.sflag [#allocation3], 1
    %396 = vsyncpa %s395, 1

</llo_original>
